<compile_context>
chip_gen: v5e
topology: v5e:2x2
jax: 0.10.0
libtpu: 0.0.40
codegen_flags: <defaults>
</compile_context>

<pallas_src>
import jax
import jax.numpy as jnp
from jax.experimental import pallas as pl
from jax.experimental.pallas import tpu as pltpu

LANE = 128  # TPU lane width; hidden dims are padded to multiples of this


def _round_up(n, m):
    return (n + m - 1) // m * m


def _vmem_capacity_bytes():
    """Physical VMEM of the current part; conservative fallback if unknown."""
    try:
        return int(pltpu.get_tpu_info().vmem_capacity_bytes)
    except Exception:
        return 64 * 1024 * 1024  # v7x per-TC VMEM (worst case across gens)


def _pick_batch_tile(B, vmem_cap_bytes):
    """Batch tile: multiple of 128 rows and >=2 grid tiles when B > 128 so the
    'parallel' batch axis actually splits across v7x's two TensorCores; larger
    cap on 128 MiB-VMEM parts (v5e/v6e) to amortize per-step overhead."""
    if B <= 128:
        return _round_up(B, 8)  # single small tile (grid = 1)
    cap = 1024 if vmem_cap_bytes >= (100 << 20) else 512
    return min(cap, _round_up((B + 1) // 2, 128))


def mlp_kernel(x_ref, w1_ref, b1_ref, w2_ref, b2_ref, w3_ref, b3_ref, o_ref):
    """Fused fc1 -> ReLU -> fc2 -> ReLU -> fc3 on one batch tile.

    Matmuls run on the MXU in the weights' dtype (bf16 by default) with f32
    accumulation; bias adds / ReLU / store are f32 on the VPU.  Biases are
    (1, out) and broadcast once per tile.
    """
    cdt = w1_ref.dtype
    x = x_ref[...].astype(cdt)  # in-kernel cast; no wrapper pad/cast HBM pass
    h1 = jnp.dot(x, w1_ref[...], preferred_element_type=jnp.float32)
    h1 = jnp.maximum(h1 + b1_ref[...], 0.0)
    h2 = jnp.dot(h1.astype(cdt), w2_ref[...], preferred_element_type=jnp.float32)
    h2 = jnp.maximum(h2 + b2_ref[...], 0.0)
    out = jnp.dot(h2.astype(cdt), w3_ref[...], preferred_element_type=jnp.float32)
    o_ref[...] = (out + b3_ref[...]).astype(o_ref.dtype)


def prepare_params(params, compute_dtype=jnp.bfloat16):
    """One-time pad + cast (hoisted out of the per-forward path).

    * hidden dims padded to multiples of 128 lanes (zero pad is exact: padded
      channels see zero weight + zero bias -> relu(0) = 0).
    * input dim and num_classes left unpadded: x is consumed as-is and the
      output block stays narrow, so per-call HBM traffic is minimal.
    * weights cast to compute_dtype (bf16 MXU / f32 accumulation); biases f32.
    """
    w1, b1, w2, b2, w3, b3 = (
        params["w1"], params["b1"], params["w2"],
        params["b2"], params["w3"], params["b3"],
    )
    input_size, hidden1 = w1.shape
    hidden2 = w2.shape[1]
    num_classes = w3.shape[1]
    H1 = _round_up(hidden1, LANE)
    H2 = _round_up(hidden2, LANE)

    def pad2(a, rows, cols, dtype):
        r, c = a.shape
        return jnp.pad(a, ((0, rows - r), (0, cols - c))).astype(dtype)

    return {
        "w1": pad2(w1, input_size, H1, compute_dtype),
        "b1": pad2(b1, 1, H1, jnp.float32),
        "w2": pad2(w2, H1, H2, compute_dtype),
        "b2": pad2(b2, 1, H2, jnp.float32),
        "w3": pad2(w3, H2, num_classes, compute_dtype),
        "b3": b3.astype(jnp.float32),
    }


def _resident(shape):
    # Constant index_map -> DMA'd once, stays VMEM-resident across all batch
    # tiles.  (The default pipeliner still allocates 2 buffers per operand; the
    # derived vmem_limit below accounts for that.  pl.Buffered(1) would halve
    # it, but is left out to keep lowering maximally portable across gens.)
    return pl.BlockSpec(shape, lambda i: (0, 0))


def neural_net_forward(x, prepared, *, block_b=None):
    """x: [B, input_size] float32.  prepared: output of `prepare_params`."""
    w1, b1, w2, b2, w3, b3 = (
        prepared["w1"], prepared["b1"], prepared["w2"],
        prepared["b2"], prepared["w3"], prepared["b3"],
    )
    B, input_size = x.shape
    assert w1.shape[0] == input_size, "prepared params / input size mismatch"
    H1 = w1.shape[1]
    H2 = w2.shape[1]
    C = w3.shape[1]  # num_classes, unpadded -> narrow lane-masked output store

    vmem_cap = _vmem_capacity_bytes()
    if block_b is None:
        block_b = _pick_batch_tile(B, vmem_cap)
    TB = _round_up(min(block_b, _round_up(B, 8)), 8)

    # No batch padding in HBM: last partial tile is masked by Pallas.
    grid = (pl.cdiv(B, TB),)

    # Derive the VMEM budget from actual tile sizes: streamed x/out (x2 buffers),
    # resident weights/biases (x2 buffers under the default pipeliner), plus the
    # f32 intermediates and their compute-dtype casts.  Clamp under physical VMEM.
    cbytes = jnp.dtype(w1.dtype).itemsize
    need = (
        2 * TB * input_size * jnp.dtype(x.dtype).itemsize
        + 2 * TB * C * 4
        + 2 * cbytes * (input_size * H1 + H1 * H2 + H2 * C)
        + 2 * 4 * (H1 + H2 + C)
        + TB * (H1 + H2) * (4 + cbytes)
    )
    ceiling = max(vmem_cap - (4 << 20), 32 << 20)
    vmem_limit = min(max(int(need * 1.5) + (8 << 20), 32 << 20), ceiling)

    out = pl.pallas_call(
        mlp_kernel,
        out_shape=jax.ShapeDtypeStruct((B, C), jnp.float32),
        grid_spec=pltpu.PrefetchScalarGridSpec(
            num_scalar_prefetch=0,
            grid=grid,
            in_specs=[
                pl.BlockSpec((TB, input_size), lambda i: (i, 0)),  # streamed x tile
                _resident((input_size, H1)), _resident((1, H1)),
                _resident((H1, H2)), _resident((1, H2)),
                _resident((H2, C)), _resident((1, C)),
            ],
            out_specs=pl.BlockSpec((TB, C), lambda i: (i, 0)),     # narrow output tile
        ),
        compiler_params=pltpu.CompilerParams(
            dimension_semantics=("parallel",),  # batch tiles shard across TCs on v7x
            vmem_limit_bytes=int(vmem_limit),
        ),
    )(x, w1, b1, w2, b2, w3, b3)
    return out


def init_params(key, input_size, hidden1, hidden2, num_classes):
    """Deterministic init mimicking nn.Linear default (uniform +-1/sqrt(fan_in)).
    Weights stored pre-transposed as [in, out]; biases as [1, out]; all f32."""
    ks = jax.random.split(key, 6)

    def linear(kw, kb, fan_in, fan_out):
        bound = 1.0 / jnp.sqrt(jnp.float32(fan_in))
        w = jax.random.uniform(kw, (fan_in, fan_out), jnp.float32, -bound, bound)
        b = jax.random.uniform(kb, (1, fan_out), jnp.float32, -bound, bound)
        return w, b

    w1, b1 = linear(ks[0], ks[1], input_size, hidden1)
    w2, b2 = linear(ks[2], ks[3], hidden1, hidden2)
    w3, b3 = linear(ks[4], ks[5], hidden2, num_classes)
    return {"w1": w1, "b1": b1, "w2": w2, "b2": b2, "w3": w3, "b3": b3}


def reference_forward(x, params):
    h1 = jnp.maximum(x @ params["w1"] + params["b1"], 0.0)
    h2 = jnp.maximum(h1 @ params["w2"] + params["b2"], 0.0)
    return h2 @ params["w3"] + params["b3"]


if __name__ == "__main__":
    key = jax.random.PRNGKey(0)
    k_x, k_x2, k_p = jax.random.split(key, 3)

    input_size, hidden1, hidden2, num_classes = 32, 64, 32, 8
    params = init_params(k_p, input_size, hidden1, hidden2, num_classes)

    # Pad/cast the weights ONCE (hoisted out of the forward path).
    prep_f32 = prepare_params(params, compute_dtype=jnp.float32)
    prep_bf16 = prepare_params(params, compute_dtype=jnp.bfloat16)

    # --- small batch (single tile, grid = 1) ---
    x_small = jax.random.normal(k_x, (8, input_size), jnp.float32)
    ref_small = reference_forward(x_small, params)

    out = jax.block_until_ready(neural_net_forward(x_small, prep_f32))
    assert out.shape == (8, num_classes)
    assert jnp.allclose(out, ref_small, atol=1e-4, rtol=1e-4), "f32 mismatch (B=8)"

    out = jax.block_until_ready(neural_net_forward(x_small, prep_bf16))
    assert out.shape == (8, num_classes)
    assert jnp.allclose(out, ref_small, atol=3e-2, rtol=3e-2), "bf16 mismatch (B=8)"

    # --- medium batch: 2 batch tiles (128-row multiples -> megacore split on
    #     v7x) and a masked partial last tile (B=300, TB=256) ---
    x_med = jax.random.normal(k_x2, (300, input_size), jnp.float32)
    ref_med = reference_forward(x_med, params)

    out = jax.block_until_ready(neural_net_forward(x_med, prep_f32))
    assert out.shape == (300, num_classes)
    assert jnp.allclose(out, ref_med, atol=1e-4, rtol=1e-4), "f32 mismatch (B=300)"

    out = jax.block_until_ready(neural_net_forward(x_med, prep_bf16))
    assert out.shape == (300, num_classes)
    assert jnp.allclose(out, ref_med, atol=3e-2, rtol=3e-2), "bf16 mismatch (B=300)"

    print("KERNEL_OK")
</pallas_src>

<mosaic_0001>
module attributes {stable_mosaic.version = 11 : i64} {
  func.func @mlp_kernel(%arg0: i32, %arg1: memref<8x32xf32, #tpu.memory_space<vmem>>, %arg2: memref<32x128xf32, #tpu.memory_space<vmem>>, %arg3: memref<1x128xf32, #tpu.memory_space<vmem>>, %arg4: memref<128x128xf32, #tpu.memory_space<vmem>>, %arg5: memref<1x128xf32, #tpu.memory_space<vmem>>, %arg6: memref<128x8xf32, #tpu.memory_space<vmem>>, %arg7: memref<1x8xf32, #tpu.memory_space<vmem>>, %arg8: memref<8x8xf32, #tpu.memory_space<vmem>>) attributes {dimension_semantics = [#tpu.dimension_semantics<parallel>], iteration_bounds = array<i64: 1>, scalar_prefetch = 0 : i64, scratch_operands = 0 : i64, tpu.core_type = #tpu.core_type<tc>, window_params = [{transform_indices = @transform_0, window_bounds = array<i64: 8, 32>}, {pipeline_mode = #tpu.pipeline_mode<synchronous>, transform_indices = @transform_1, window_bounds = array<i64: 32, 128>}, {pipeline_mode = #tpu.pipeline_mode<synchronous>, transform_indices = @transform_2, window_bounds = array<i64: 1, 128>}, {pipeline_mode = #tpu.pipeline_mode<synchronous>, transform_indices = @transform_3, window_bounds = array<i64: 128, 128>}, {pipeline_mode = #tpu.pipeline_mode<synchronous>, transform_indices = @transform_4, window_bounds = array<i64: 1, 128>}, {pipeline_mode = #tpu.pipeline_mode<synchronous>, transform_indices = @transform_5, window_bounds = array<i64: 128, 8>}, {pipeline_mode = #tpu.pipeline_mode<synchronous>, transform_indices = @transform_6, window_bounds = array<i64: 1, 8>}, {transform_indices = @transform_7, window_bounds = array<i64: 8, 8>}]} {
    %c0 = arith.constant 0 : index
    %c0_0 = arith.constant 0 : index
    %0 = vector.load %arg1[%c0, %c0_0] : memref<8x32xf32, #tpu.memory_space<vmem>>, vector<8x32xf32>
    %c0_1 = arith.constant 0 : index
    %c0_2 = arith.constant 0 : index
    %1 = vector.load %arg2[%c0_1, %c0_2] : memref<32x128xf32, #tpu.memory_space<vmem>>, vector<32x128xf32>
    %cst = arith.constant dense<0.000000e+00> : vector<8x128xf32>
    %2 = tpu.matmul %0, %1, %cst {dimension_numbers = #tpu.dot_dimension_numbers<[1], [0], [0], [1], [0, 0, 1, 1], [], []>} : vector<8x32xf32>, vector<32x128xf32>, vector<8x128xf32> -> vector<8x128xf32>
    %c0_3 = arith.constant 0 : index
    %c0_4 = arith.constant 0 : index
    %3 = vector.load %arg3[%c0_3, %c0_4] : memref<1x128xf32, #tpu.memory_space<vmem>>, vector<1x128xf32>
    %4 = vector.broadcast %3 : vector<1x128xf32> to vector<8x128xf32>
    %5 = arith.addf %2, %4 : vector<8x128xf32>
    %cst_5 = arith.constant 0.000000e+00 : f32
    %6 = vector.broadcast %cst_5 : f32 to vector<8x128xf32>
    %7 = arith.maximumf %5, %6 : vector<8x128xf32>
    %c0_6 = arith.constant 0 : index
    %c0_7 = arith.constant 0 : index
    %8 = vector.load %arg4[%c0_6, %c0_7] : memref<128x128xf32, #tpu.memory_space<vmem>>, vector<128x128xf32>
    %cst_8 = arith.constant dense<0.000000e+00> : vector<8x128xf32>
    %9 = tpu.matmul %7, %8, %cst_8 {dimension_numbers = #tpu.dot_dimension_numbers<[1], [0], [0], [1], [0, 0, 1, 1], [], []>} : vector<8x128xf32>, vector<128x128xf32>, vector<8x128xf32> -> vector<8x128xf32>
    %c0_9 = arith.constant 0 : index
    %c0_10 = arith.constant 0 : index
    %10 = vector.load %arg5[%c0_9, %c0_10] : memref<1x128xf32, #tpu.memory_space<vmem>>, vector<1x128xf32>
    %11 = vector.broadcast %10 : vector<1x128xf32> to vector<8x128xf32>
    %12 = arith.addf %9, %11 : vector<8x128xf32>
    %cst_11 = arith.constant 0.000000e+00 : f32
    %13 = vector.broadcast %cst_11 : f32 to vector<8x128xf32>
    %14 = arith.maximumf %12, %13 : vector<8x128xf32>
    %c0_12 = arith.constant 0 : index
    %c0_13 = arith.constant 0 : index
    %15 = vector.load %arg6[%c0_12, %c0_13] : memref<128x8xf32, #tpu.memory_space<vmem>>, vector<128x8xf32>
    %cst_14 = arith.constant dense<0.000000e+00> : vector<8x8xf32>
    %16 = tpu.matmul %14, %15, %cst_14 {dimension_numbers = #tpu.dot_dimension_numbers<[1], [0], [0], [1], [0, 0, 1, 1], [], []>} : vector<8x128xf32>, vector<128x8xf32>, vector<8x8xf32> -> vector<8x8xf32>
    %c0_15 = arith.constant 0 : index
    %c0_16 = arith.constant 0 : index
    %17 = vector.load %arg7[%c0_15, %c0_16] : memref<1x8xf32, #tpu.memory_space<vmem>>, vector<1x8xf32>
    %18 = vector.broadcast %17 : vector<1x8xf32> to vector<8x8xf32>
    %19 = arith.addf %16, %18 : vector<8x8xf32>
    %c0_17 = arith.constant 0 : index
    %c0_18 = arith.constant 0 : index
    %20 = vector.load %arg8[%c0_17, %c0_18] : memref<8x8xf32, #tpu.memory_space<vmem>>, vector<8x8xf32>
    tpu.vector_store %arg8[%c0_17, %c0_18], %19 {strides = array<i32>} : memref<8x8xf32, #tpu.memory_space<vmem>>, vector<8x8xf32>,
    return
  }
  func.func @transform_0(%arg0: i32) -> (i32, i32) {
    %c0_i32 = arith.constant 0 : i32
    %c0_i32_0 = arith.constant 0 : i32
    return %arg0, %c0_i32 : i32, i32
  }
  func.func @transform_1(%arg0: i32) -> (i32, i32) {
    %c0_i32 = arith.constant 0 : i32
    %c0_i32_0 = arith.constant 0 : i32
    %c0_i32_1 = arith.constant 0 : i32
    return %c0_i32, %c0_i32_0 : i32, i32
  }
  func.func @transform_2(%arg0: i32) -> (i32, i32) {
    %c0_i32 = arith.constant 0 : i32
    %c0_i32_0 = arith.constant 0 : i32
    %c0_i32_1 = arith.constant 0 : i32
    return %c0_i32, %c0_i32_0 : i32, i32
  }
  func.func @transform_3(%arg0: i32) -> (i32, i32) {
    %c0_i32 = arith.constant 0 : i32
    %c0_i32_0 = arith.constant 0 : i32
    %c0_i32_1 = arith.constant 0 : i32
    return %c0_i32, %c0_i32_0 : i32, i32
  }
  func.func @transform_4(%arg0: i32) -> (i32, i32) {
    %c0_i32 = arith.constant 0 : i32
    %c0_i32_0 = arith.constant 0 : i32
    %c0_i32_1 = arith.constant 0 : i32
    return %c0_i32, %c0_i32_0 : i32, i32
  }
  func.func @transform_5(%arg0: i32) -> (i32, i32) {
    %c0_i32 = arith.constant 0 : i32
    %c0_i32_0 = arith.constant 0 : i32
    %c0_i32_1 = arith.constant 0 : i32
    return %c0_i32, %c0_i32_0 : i32, i32
  }
  func.func @transform_6(%arg0: i32) -> (i32, i32) {
    %c0_i32 = arith.constant 0 : i32
    %c0_i32_0 = arith.constant 0 : i32
    %c0_i32_1 = arith.constant 0 : i32
    return %c0_i32, %c0_i32_0 : i32, i32
  }
  func.func @transform_7(%arg0: i32) -> (i32, i32) {
    %c0_i32 = arith.constant 0 : i32
    %c0_i32_0 = arith.constant 0 : i32
    return %arg0, %c0_i32 : i32, i32
  }
}

</mosaic_0001>

<llo_original>
// kernel: tpu_custom_call.1
$region0: #{tpu_custom_call.1}
  #allocation0 [shape = 'u32[]', space=smem, size = 0x4, offset = 0x4, fixed_abs, tag = 'smem constant byte address 0x4 - core index']
  #allocation1 [shape = 'u32[72,128]{1,0:T(1,128)}', space=vmem, size = 0x9000, scoped, tag = 'internal scratch']
  %s0 = inlined_call_operand.vmem [shape: f32[8,32], index: 0, kind: input, shape index: {}]
  %s1 = inlined_call_operand.hbm [shape: f32[32,128], index: 1, kind: input, shape index: {}]
  %s2 = inlined_call_operand.vmem [shape: f32[1,128], index: 2, kind: input, shape index: {}]
  %s3 = inlined_call_operand.vmem [shape: f32[128,128], index: 3, kind: input, shape index: {}]
  %s4 = inlined_call_operand.vmem [shape: f32[1,128], index: 4, kind: input, shape index: {}]
  %s5 = inlined_call_operand.vmem [shape: f32[128,8], index: 5, kind: input, shape index: {}]
  %s6 = inlined_call_operand.vmem [shape: f32[1,8], index: 6, kind: input, shape index: {}]
  %s7 = inlined_call_operand.hbm [shape: f32[8,8], index: 7, kind: output, shape index: {}]
  %s8 = sld [smem:[#allocation0]]
  $region42: #{tpu_custom_call.1} parent=0
    _
  %s10 = ssub.s32 1, %s8
  %s11 = scalar_select 0, %s10, %s8
  $region1: #{tpu_custom_call.1} parent=0
    #allocation2 [shape = 'u8[16384]{0}', space=vmem, size = 0x4000, scoped, tag = 'input window, operand 1, single buffered']
    #allocation3 [shape = 's32[1]{0}', space=sflag, size = 0x4, scoped, tag = 'scoped memory for tpu_custom_call.1']
    #allocation4 [shape = 's32[1]{0}', space=sflag, size = 0x4, scoped, tag = 'scoped memory for tpu_custom_call.1']
    #allocation5 [shape = 'u8[4096]{0}', space=vmem, size = 0x1000, scoped, tag = 'output window, operand 0, single buffered']
    %12 = vsyncpa [#allocation3], 0
    %13 = vsyncpa [#allocation4], 0
    // Predicated region
    $region2: #{tpu_custom_call.1} parent=1 // pred_check
      _
    $region3: #{tpu_custom_call.1} parent=1 // pred_check_branch
      %15 = sbr.rel (0) target = $region5
    $region4: #{tpu_custom_call.1} parent=1 // pred_region
      _
    $region5: #{tpu_custom_call.1} parent=1 // pred_fallthru
      _
    // Predicated region
    $region6: #{tpu_custom_call.1} parent=1 // pred_check
      _
    $region7: #{tpu_custom_call.1} parent=1 // pred_check_branch
      %17 = sbr.rel (0) target = $region9
    $region8: #{tpu_custom_call.1} parent=1 // pred_region
      %19 = vsyncadd [#allocation3], 0
      %s20 = sshll.u32 %s1, 4
      %s21 = int_to_ptr.hbm [resolvable:$true] %s20
      %s22 = sshll.u32 [#allocation2], 4
      %s23 = int_to_ptr.vmem [resolvable:$true] %s22
      %28 = dma.hbm_to_vmem [thread:$0]  %s21, 512, %s23, [#allocation3], 128, 128, 8
    $region9: #{tpu_custom_call.1} parent=1 // pred_fallthru
      _
    // Predicated region
    $region10: #{tpu_custom_call.1} parent=1 // pred_check
      _
    $region11: #{tpu_custom_call.1} parent=1 // pred_check_branch
      %30 = sbr.rel (0) target = $region13
    $region12: #{tpu_custom_call.1} parent=1 // pred_region
      _
    $region13: #{tpu_custom_call.1} parent=1 // pred_fallthru
      _
    // Predicated region
    $region14: #{tpu_custom_call.1} parent=1 // pred_check
      _
    $region15: #{tpu_custom_call.1} parent=1 // pred_check_branch
      %32 = sbr.rel (0) target = $region17
    $region16: #{tpu_custom_call.1} parent=1 // pred_region
      _
    $region17: #{tpu_custom_call.1} parent=1 // pred_fallthru
      _
    // Predicated region
    $region18: #{tpu_custom_call.1} parent=1 // pred_check
      _
    $region19: #{tpu_custom_call.1} parent=1 // pred_check_branch
      %34 = sbr.rel (0) target = $region21
    $region20: #{tpu_custom_call.1} parent=1 // pred_region
      _
    $region21: #{tpu_custom_call.1} parent=1 // pred_fallthru
      _
    // Predicated region
    $region22: #{tpu_custom_call.1} parent=1 // pred_check
      _
    $region23: #{tpu_custom_call.1} parent=1 // pred_check_branch
      %36 = sbr.rel (0) target = $region25
    $region24: #{tpu_custom_call.1} parent=1 // pred_region
      _
    $region25: #{tpu_custom_call.1} parent=1 // pred_fallthru
      _
    // Predicated region
    $region26: #{tpu_custom_call.1} parent=1 // pred_check
      _
    $region27: #{tpu_custom_call.1} parent=1 // pred_check_branch
      %38 = sbr.rel (0) target = $region29
    $region28: #{tpu_custom_call.1} parent=1 // pred_region
      _
    $region29: #{tpu_custom_call.1} parent=1 // pred_fallthru
      _
    // Predicated region
    $region30: #{tpu_custom_call.1} parent=1 // pred_check
      _
    $region31: #{tpu_custom_call.1} parent=1 // pred_check_branch
      %40 = sbr.rel (0) target = $region33
    $region32: #{tpu_custom_call.1} parent=1 // pred_region
      %42 = dma.done [#allocation3], 512
    $region33: #{tpu_custom_call.1} parent=1 // pred_fallthru
      _
    %v43 = vld [vmem:[%s0] sm:$0xff]
    %v44 = vld [vmem:[#allocation2] sm:$0xff]
    %v45 = vld [vmem:[#allocation2 + $0x8] sm:$0xff]
    %v46 = vld [vmem:[#allocation2 + $0x10] sm:$0xff]
    %v47 = vld [vmem:[#allocation2 + $0x18] sm:$0xff]
    %v48 = vld [vmem:[%s2] sm:$0x1]
    %v50 = vperm.slane %v48, 0
    %vm52 = vcmask 261120
    %v54 = vsel %vm52, %v43, 0
    %56 = vmatpush.msra.mxu0 0.0
    %57 = vmatpush.msra.mxu0 0.0
    %58 = vmatpush.msra.mxu0 0.0
    %59 = vmatpush.msra.mxu0 0.0
    %60 = vmatpush.msra.mxu0 0.0
    %61 = vmatpush.msra.mxu0 0.0
    %62 = vmatpush.msra.mxu0 0.0
    %63 = vmatpush.msra.mxu0 0.0
    %64 = vmatpush.msra.mxu0 0.0
    %65 = vmatpush.msra.mxu0 0.0
    %66 = vmatpush.msra.mxu0 0.0
    %67 = vmatpush.msra.mxu0 0.0
    %68 = vmatpush.msra.mxu0 %v47
    %69 = vmatpush.msra.mxu0 %v46
    %70 = vmatpush.msra.mxu0 %v45
    %71 = vmatpush.msra.mxu0 %v44
    %72 = vmatmul.f32.gmra.mxu0 %v54
    %v73 = vpop.f32.mrf.mxu0
    %v74 = vadd.f32 %v50, %v73
    %75 = vdwg.mxu0
    %v76 = vmax.f32 %v74, 0.0
    %v77 = vld [vmem:[%s3] sm:$0xff]
    %v78 = vld [vmem:[%s3 + $0x8] sm:$0xff]
    %v79 = vld [vmem:[%s3 + $0x10] sm:$0xff]
    %v80 = vld [vmem:[%s3 + $0x18] sm:$0xff]
    %v81 = vld [vmem:[%s3 + $0x20] sm:$0xff]
    %v82 = vld [vmem:[%s3 + $0x28] sm:$0xff]
    %v83 = vld [vmem:[%s3 + $0x30] sm:$0xff]
    %v84 = vld [vmem:[%s3 + $0x38] sm:$0xff]
    %v85 = vld [vmem:[%s3 + $0x40] sm:$0xff]
    %v86 = vld [vmem:[%s3 + $0x48] sm:$0xff]
    %v87 = vld [vmem:[%s3 + $0x50] sm:$0xff]
    %v88 = vld [vmem:[%s3 + $0x58] sm:$0xff]
    %v89 = vld [vmem:[%s3 + $0x60] sm:$0xff]
    %v90 = vld [vmem:[%s3 + $0x68] sm:$0xff]
    %v91 = vld [vmem:[%s3 + $0x70] sm:$0xff]
    %v92 = vld [vmem:[%s3 + $0x78] sm:$0xff]
    %v93 = vld [vmem:[%s4] sm:$0x1]
    %v95 = vperm.slane %v93, 0
    %97 = vmatpush.msra.mxu0 %v92
    %98 = vmatpush.msra.mxu0 %v91
    %99 = vmatpush.msra.mxu0 %v90
    %100 = vmatpush.msra.mxu0 %v89
    %101 = vmatpush.msra.mxu0 %v88
    %102 = vmatpush.msra.mxu0 %v87
    %103 = vmatpush.msra.mxu0 %v86
    %104 = vmatpush.msra.mxu0 %v85
    %105 = vmatpush.msra.mxu0 %v84
    %106 = vmatpush.msra.mxu0 %v83
    %107 = vmatpush.msra.mxu0 %v82
    %108 = vmatpush.msra.mxu0 %v81
    %109 = vmatpush.msra.mxu0 %v80
    %110 = vmatpush.msra.mxu0 %v79
    %111 = vmatpush.msra.mxu0 %v78
    %112 = vmatpush.msra.mxu0 %v77
    %113 = vmatmul.f32.gmra.mxu0 %v76
    %v114 = vpop.f32.mrf.mxu0
    %v115 = vadd.f32 %v95, %v114
    %116 = vdwg.mxu0
    %v117 = vmax.f32 %v115, 0.0
    %v118 = vld [vmem:[%s5] sm:$0xff]
    %v119 = vld [vmem:[%s5 + $0x8] sm:$0xff]
    %v120 = vld [vmem:[%s5 + $0x10] sm:$0xff]
    %v121 = vld [vmem:[%s5 + $0x18] sm:$0xff]
    %v122 = vld [vmem:[%s5 + $0x20] sm:$0xff]
    %v123 = vld [vmem:[%s5 + $0x28] sm:$0xff]
    %v124 = vld [vmem:[%s5 + $0x30] sm:$0xff]
    %v125 = vld [vmem:[%s5 + $0x38] sm:$0xff]
    %v126 = vld [vmem:[%s5 + $0x40] sm:$0xff]
    %v127 = vld [vmem:[%s5 + $0x48] sm:$0xff]
    %v128 = vld [vmem:[%s5 + $0x50] sm:$0xff]
    %v129 = vld [vmem:[%s5 + $0x58] sm:$0xff]
    %v130 = vld [vmem:[%s5 + $0x60] sm:$0xff]
    %v131 = vld [vmem:[%s5 + $0x68] sm:$0xff]
    %v132 = vld [vmem:[%s5 + $0x70] sm:$0xff]
    %v133 = vld [vmem:[%s5 + $0x78] sm:$0xff]
    %v134 = vld [vmem:[%s6] sm:$0x1]
    %v136 = vperm.slane %v134, 0
    %138 = vmatpush.msra.mxu0 %v133
    %139 = vmatpush.msra.mxu0 %v132
    %140 = vmatpush.msra.mxu0 %v131
    %141 = vmatpush.msra.mxu0 %v130
    %142 = vmatpush.msra.mxu0 %v129
    %143 = vmatpush.msra.mxu0 %v128
    %144 = vmatpush.msra.mxu0 %v127
    %145 = vmatpush.msra.mxu0 %v126
    %146 = vmatpush.msra.mxu0 %v125
    %147 = vmatpush.msra.mxu0 %v124
    %148 = vmatpush.msra.mxu0 %v123
    %149 = vmatpush.msra.mxu0 %v122
    %150 = vmatpush.msra.mxu0 %v121
    %151 = vmatpush.msra.mxu0 %v120
    %152 = vmatpush.msra.mxu0 %v119
    %153 = vmatpush.msra.mxu0 %v118
    %154 = vmatmul.f32.gmra.mxu0 %v117
    %v155 = vpop.f32.mrf.mxu0
    %v156 = vadd.f32 %v136, %v155
    %157 = vdwg.mxu0
    %vm158 = vcmask 64512
    %159 = vst.msk [vmem:[#allocation5] sm:$0xff] %vm158, %v156
    // Predicated region
    $region34: #{tpu_custom_call.1} parent=1 // pred_check
      _
    $region35: #{tpu_custom_call.1} parent=1 // pred_check_branch
      %161 = sbr.rel (0) target = $region37
    $region36: #{tpu_custom_call.1} parent=1 // pred_region
      %163 = vsyncadd [#allocation4], 0
      %s165 = sshll.u32 [#allocation5], 4
      %s166 = int_to_ptr.vmem [resolvable:$true] %s165
      %s167 = sshll.u32 %s7, 4
      %s168 = int_to_ptr.hbm [resolvable:$true] %s167
      %170 = dma.vmem_to_hbm [thread:$0]  %s166, 128, %s168, [#allocation4]
    $region37: #{tpu_custom_call.1} parent=1 // pred_fallthru
      _
    // Predicated region
    $region38: #{tpu_custom_call.1} parent=1 // pred_check
      _
    $region39: #{tpu_custom_call.1} parent=1 // pred_check_branch
      %172 = sbr.rel (0) target = $region41
    $region40: #{tpu_custom_call.1} parent=1 // pred_region
      %174 = dma.done [#allocation4], 128
    $region41: #{tpu_custom_call.1} parent=1 // pred_fallthru
      _
    %175 = vsyncpa [#allocation3], 1
    %176 = vsyncpa [#allocation4], 1

</llo_original>
